<compile_context>
chip_gen: v6e
topology: v6e:2x2x1
jax: 0.10.0
libtpu: 0.0.40
codegen_flags: <defaults>
</compile_context>

<pallas_src>
import functools

import jax
import jax.numpy as jnp
from jax import lax
from jax.experimental import pallas as pl
from jax.experimental.pallas import tpu as pltpu


# ----------------------------- Pallas kernel ------------------------------ #
def mfm_kernel(x_ref, y_ref,
               w1x_ref, w1y_ref, b1_ref,
               w2a_ref, b2a_ref, w2b_ref, b2b_ref,
               w3a_ref, b3a_ref, w3b_ref, b3b_ref,
               pool_ref,
               o_ref, *, inv_hw):
    f32 = jnp.float32
    bf16 = jnp.bfloat16

    # One grid step = one (n, TD*H*W) pixel slab, channels on sublanes.
    x = x_ref[0]                                               # (Cx, P) bf16
    y = y_ref[0]                                               # (Cy, P) bf16

    # layer1: conv1x1x1 (BN scale folded into bf16 weights) -> +shift -> ReLU.
    # First conv is split over the implicit channel concat [x, y].
    z = jnp.dot(w1x_ref[...], x, preferred_element_type=f32)
    z = z + jnp.dot(w1y_ref[...], y, preferred_element_type=f32)
    z = jnp.maximum(z + b1_ref[...], 0.0)                      # (Cout, P) f32
    zb = z.astype(bf16)

    # local_att_layer: conv -> BN -> ReLU -> conv -> BN (per pixel).
    la = jnp.dot(w2a_ref[...], zb, preferred_element_type=f32)
    la = jnp.maximum(la + b2a_ref[...], 0.0)                   # (Cmid, P)
    la = jnp.dot(w2b_ref[...], la.astype(bf16), preferred_element_type=f32)
    la = la + b2b_ref[...]                                     # (Cout, P) f32

    # global_att_layer: mean over H,W per depth slab (binary 0/1 pool matmul,
    # 1/HW applied on the VPU), conv/BN/ReLU/conv/BN on the tiny (.,TD)
    # tensor, then broadcast back by contracting the same pool matrix.
    g = jnp.dot(zb, pool_ref[...], preferred_element_type=f32) * inv_hw  # (Cout, TD)
    ga = jnp.dot(w3a_ref[...], g.astype(bf16), preferred_element_type=f32)
    ga = jnp.maximum(ga + b3a_ref[...], 0.0)                   # (Cmid, TD)
    ga = jnp.dot(w3b_ref[...], ga.astype(bf16), preferred_element_type=f32)
    ga = (ga + b3b_ref[...]).astype(bf16)                      # (Cout, TD)
    ga_full = lax.dot_general(                                 # (Cout, P) f32
        ga, pool_ref[...],
        dimension_numbers=(((1,), (1,)), ((), ())),
        preferred_element_type=f32)

    # y + x * sigmoid(local_att + global_att)
    att = jax.nn.sigmoid(la + ga_full)
    o_ref[0] = (y.astype(f32) + z * att).astype(o_ref.dtype)


# ------------------------------ tiling logic ------------------------------- #
def _tpu_vmem_bytes():
    try:
        return int(pltpu.get_tpu_info().vmem_capacity_bytes)
    except Exception:
        return 128 << 20


def _choose_tiling(N, D, HW, Cx, Cy, Cout):
    """Pick TD (#depth slabs / grid step) and a VMEM limit.

    Constraints: D % TD == 0 and (TD*HW % 128 == 0 or TD == D) so the pixel
    (lane) tile is lane-dense; footprint kept under an explicit VMEM budget;
    prefer >= 4 grid steps so v7x's two TensorCores + the pipeline stay fed.
    """
    vmem_cap = _tpu_vmem_bytes()
    # per-generation pixel-tile target (~0.5-1 MiB of per-step data DMA);
    # smaller on v7x (64 MiB VMEM per TensorCore).
    target_pixels = 8192 if vmem_cap <= (64 << 20) else 16384
    budget = min(20 << 20, vmem_cap // 4)

    def footprint(td):
        pt = td * HW
        data = 2 * (Cx + Cy + Cout) * pt * 2    # double-buffered bf16 data blocks
        pool = pt * td * 2                      # single-buffered bf16 pool matrix
        return data + pool

    cands = [t for t in range(1, D + 1)
             if D % t == 0 and ((t * HW) % 128 == 0 or t == D)]
    fitting = [t for t in cands if footprint(t) <= budget] or [min(cands)]
    within = [t for t in fitting if t * HW <= target_pixels] or [min(fitting)]
    td = max(within)
    if N * (D // td) < 4:                       # keep the grid/pipeline fed
        smaller = [t for t in within if N * (D // t) >= 4]
        if smaller:
            td = max(smaller)

    vmem_limit = int(min(max(32 << 20, 1.5 * footprint(td) + (4 << 20)),
                         max(32 << 20, vmem_cap - (4 << 20))))
    return td, vmem_limit


# --------------------------------- wrapper --------------------------------- #
def mfm_forward(x, y, P):
    """x: (N, Cx, D, H, W), y: (N, Cy, D, H, W) with Cy == out_channel."""
    N, Cx, D, H, W = x.shape
    _, Cy, _, _, _ = y.shape
    Cout = P["w1x"].shape[0]
    Cmid = P["w2a"].shape[0]
    assert Cy == Cout, "y + x*att requires out_channel == channels of y"
    assert P["w1x"].shape[1] == Cx and P["w1y"].shape[1] == Cy

    HW = H * W
    TD, vmem_limit = _choose_tiling(N, D, HW, Cx, Cy, Cout)
    Pt = TD * HW
    grid = (N, D // TD)

    bf16 = jnp.bfloat16
    # bf16 at the kernel boundary (in a full model the producer would already
    # emit bf16).  NCDHW -> (N, C, D*H*W) reshapes are free/contiguous.
    xv = x.astype(bf16).reshape(N, Cx, D * HW)
    yv = y.astype(bf16).reshape(N, Cy, D * HW)

    # Binary 0/1 pooling matrix (exact in bf16); 1/HW applied in-kernel (f32).
    pool = jnp.repeat(jnp.eye(TD, dtype=bf16), HW, axis=0)      # (Pt, TD)

    # Conv weights (BN scale already folded) in bf16; BN shifts stay f32.
    wb = {k: P[k].astype(bf16)
          for k in ("w1x", "w1y", "w2a", "w2b", "w3a", "w3b")}

    def data_spec(c):
        return pl.BlockSpec((1, c, Pt), lambda n, dt: (n, 0, dt))

    def const_spec(arr):
        nd = arr.ndim
        return pl.BlockSpec(arr.shape, lambda n, dt, _nd=nd: (0,) * _nd,
                            pipeline_mode=pl.Buffered(1))

    in_specs = [
        data_spec(Cx), data_spec(Cy),
        const_spec(wb["w1x"]), const_spec(wb["w1y"]), const_spec(P["b1"]),
        const_spec(wb["w2a"]), const_spec(P["b2a"]),
        const_spec(wb["w2b"]), const_spec(P["b2b"]),
        const_spec(wb["w3a"]), const_spec(P["b3a"]),
        const_spec(wb["w3b"]), const_spec(P["b3b"]),
        const_spec(pool),
    ]

    # Advisory cost estimate: memory-bound kernel, help XLA overlap neighbours.
    pixels = N * D * HW
    flops = int(pixels * (2 * (Cx + Cy) * Cout + 4 * Cmid * Cout + 4 * Cout)
                + N * D * 4 * Cmid * Cout)
    bytes_accessed = int(pixels * (Cx + Cy + Cout) * 2
                         + sum(int(v.size) * 2 for v in wb.values())
                         + Pt * TD * 2)
    cost = pl.CostEstimate(flops=flops,
                           transcendentals=int(pixels * Cout),
                           bytes_accessed=bytes_accessed)

    out_v = pl.pallas_call(
        functools.partial(mfm_kernel, inv_hw=1.0 / HW),
        out_shape=jax.ShapeDtypeStruct((N, Cout, D * HW), bf16),
        grid_spec=pltpu.PrefetchScalarGridSpec(
            num_scalar_prefetch=0,
            grid=grid,
            in_specs=in_specs,
            out_specs=pl.BlockSpec((1, Cout, Pt), lambda n, dt: (n, 0, dt)),
        ),
        compiler_params=pltpu.CompilerParams(
            dimension_semantics=("parallel", "parallel"),
            vmem_limit_bytes=vmem_limit),
        cost_estimate=cost,
    )(xv, yv,
      wb["w1x"], wb["w1y"], P["b1"],
      wb["w2a"], P["b2a"], wb["w2b"], P["b2b"],
      wb["w3a"], P["b3a"], wb["w3b"], P["b3b"],
      pool)

    return out_v.reshape(N, Cout, D, H, W)


# -------------------------- plain-JAX reference --------------------------- #
def mfm_ref(x, y, P):
    N, Cx, D, H, W = x.shape
    Cy = y.shape[1]
    HW = H * W
    xv = x.reshape(N, Cx, D * HW)
    yv = y.reshape(N, Cy, D * HW)

    z = (jnp.einsum('oc,ncp->nop', P["w1x"], xv)
         + jnp.einsum('oc,ncp->nop', P["w1y"], yv))
    z = jnp.maximum(z + P["b1"][None], 0.0)                    # (N,Cout,D*HW)

    la = jnp.maximum(jnp.einsum('mc,ncp->nmp', P["w2a"], z) + P["b2a"][None], 0.0)
    la = jnp.einsum('om,nmp->nop', P["w2b"], la) + P["b2b"][None]

    Cout = z.shape[1]
    g = z.reshape(N, Cout, D, HW).mean(axis=-1)                # (N,Cout,D)
    ga = jnp.maximum(jnp.einsum('mc,ncd->nmd', P["w3a"], g) + P["b3a"][None], 0.0)
    ga = jnp.einsum('om,nmd->nod', P["w3b"], ga) + P["b3b"][None]
    ga_full = jnp.repeat(ga, HW, axis=-1)                      # (N,Cout,D*HW)

    out = yv + z * jax.nn.sigmoid(la + ga_full)
    return out.reshape(N, Cout, D, H, W)


# ------------------------- deterministic params ---------------------------- #
def make_params(key, cx, cy, out_channel, eps=1e-5):
    """Transposed (Cout,Cin) 1x1x1 conv weights with BN scale folded in (f32)."""
    cm = max(out_channel // 4, 1)
    counter = [0]

    def nk():
        counter[0] += 1
        return jax.random.fold_in(key, counter[0])

    def conv_wT(cin, cout):
        return (0.1 * jax.random.normal(nk(), (cout, cin))).astype(jnp.float32)

    def bn(c):
        gamma = 1.0 + 0.1 * jax.random.normal(nk(), (c, 1))
        beta = 0.1 * jax.random.normal(nk(), (c, 1))
        mean = 0.1 * jax.random.normal(nk(), (c, 1))
        var = jax.random.uniform(nk(), (c, 1), minval=0.5, maxval=1.5)
        scale = gamma / jnp.sqrt(var + eps)
        shift = beta - mean * scale
        return scale.astype(jnp.float32), shift.astype(jnp.float32)

    cin = cx + cy
    w1T = conv_wT(cin, out_channel);  s1, b1 = bn(out_channel)
    w2aT = conv_wT(out_channel, cm);  s2a, b2a = bn(cm)
    w2bT = conv_wT(cm, out_channel);  s2b, b2b = bn(out_channel)
    w3aT = conv_wT(out_channel, cm);  s3a, b3a = bn(cm)
    w3bT = conv_wT(cm, out_channel);  s3b, b3b = bn(out_channel)

    # Fold BN scale into the (bias-free) conv weights; shifts stay as biases.
    w1f = s1 * w1T
    return {
        "w1x": w1f[:, :cx], "w1y": w1f[:, cx:], "b1": b1,
        "w2a": s2a * w2aT, "b2a": b2a,
        "w2b": s2b * w2bT, "b2b": b2b,
        "w3a": s3a * w3aT, "b3a": b3a,
        "w3b": s3b * w3bT, "b3b": b3b,
    }


# --------------------------------- main ------------------------------------ #
if __name__ == "__main__":
    # x (N,Cx,D,H,W), y (N,Cy,D,H,W); in_channel = Cx+Cy, out_channel = Cy
    # (required by `y + x * att`).
    N, Cx, Cy, D, H, W = 2, 4, 8, 4, 8, 8
    out_channel = Cy

    key = jax.random.PRNGKey(0)
    kx, ky, kp = jax.random.split(key, 3)
    x = jax.random.normal(kx, (N, Cx, D, H, W), dtype=jnp.float32)
    y = jax.random.normal(ky, (N, Cy, D, H, W), dtype=jnp.float32)
    P = make_params(kp, Cx, Cy, out_channel)

    out = jax.block_until_ready(mfm_forward(x, y, P))

    # Reference in f32 on the same bf16-quantized inputs (kernel I/O is bf16).
    xq = x.astype(jnp.bfloat16).astype(jnp.float32)
    yq = y.astype(jnp.bfloat16).astype(jnp.float32)
    ref = mfm_ref(xq, yq, P)

    assert out.shape == y.shape
    err = float(jnp.max(jnp.abs(out.astype(jnp.float32) - ref)))
    assert err < 5e-2, f"mismatch vs reference (max abs err {err})"
    print("KERNEL_OK")
</pallas_src>

<mosaic_0001>
module attributes {stable_mosaic.version = 11 : i64} {
  func.func @mfm_kernel(%arg0: i32, %arg1: i32, %arg2: memref<1x4x128xbf16, #tpu.memory_space<vmem>>, %arg3: memref<1x8x128xbf16, #tpu.memory_space<vmem>>, %arg4: memref<8x4xbf16, #tpu.memory_space<vmem>>, %arg5: memref<8x8xbf16, #tpu.memory_space<vmem>>, %arg6: memref<8x1xf32, #tpu.memory_space<vmem>>, %arg7: memref<2x8xbf16, #tpu.memory_space<vmem>>, %arg8: memref<2x1xf32, #tpu.memory_space<vmem>>, %arg9: memref<8x2xbf16, #tpu.memory_space<vmem>>, %arg10: memref<8x1xf32, #tpu.memory_space<vmem>>, %arg11: memref<2x8xbf16, #tpu.memory_space<vmem>>, %arg12: memref<2x1xf32, #tpu.memory_space<vmem>>, %arg13: memref<8x2xbf16, #tpu.memory_space<vmem>>, %arg14: memref<8x1xf32, #tpu.memory_space<vmem>>, %arg15: memref<128x2xbf16, #tpu.memory_space<vmem>>, %arg16: memref<1x8x128xbf16, #tpu.memory_space<vmem>>) attributes {dimension_semantics = [#tpu.dimension_semantics<parallel>, #tpu.dimension_semantics<parallel>], iteration_bounds = array<i64: 2, 2>, scalar_prefetch = 0 : i64, scratch_operands = 0 : i64, tpu.core_type = #tpu.core_type<tc>, window_params = [{transform_indices = @transform_0, window_bounds = array<i64: 1, 4, 128>}, {transform_indices = @transform_1, window_bounds = array<i64: 1, 8, 128>}, {pipeline_mode = #tpu.pipeline_mode<synchronous>, transform_indices = @transform_2, window_bounds = array<i64: 8, 4>}, {pipeline_mode = #tpu.pipeline_mode<synchronous>, transform_indices = @transform_3, window_bounds = array<i64: 8, 8>}, {pipeline_mode = #tpu.pipeline_mode<synchronous>, transform_indices = @transform_4, window_bounds = array<i64: 8, 1>}, {pipeline_mode = #tpu.pipeline_mode<synchronous>, transform_indices = @transform_5, window_bounds = array<i64: 2, 8>}, {pipeline_mode = #tpu.pipeline_mode<synchronous>, transform_indices = @transform_6, window_bounds = array<i64: 2, 1>}, {pipeline_mode = #tpu.pipeline_mode<synchronous>, transform_indices = @transform_7, window_bounds = array<i64: 8, 2>}, {pipeline_mode = #tpu.pipeline_mode<synchronous>, transform_indices = @transform_8, window_bounds = array<i64: 8, 1>}, {pipeline_mode = #tpu.pipeline_mode<synchronous>, transform_indices = @transform_9, window_bounds = array<i64: 2, 8>}, {pipeline_mode = #tpu.pipeline_mode<synchronous>, transform_indices = @transform_10, window_bounds = array<i64: 2, 1>}, {pipeline_mode = #tpu.pipeline_mode<synchronous>, transform_indices = @transform_11, window_bounds = array<i64: 8, 2>}, {pipeline_mode = #tpu.pipeline_mode<synchronous>, transform_indices = @transform_12, window_bounds = array<i64: 8, 1>}, {pipeline_mode = #tpu.pipeline_mode<synchronous>, transform_indices = @transform_13, window_bounds = array<i64: 128, 2>}, {transform_indices = @transform_14, window_bounds = array<i64: 1, 8, 128>}]} {
    %c0 = arith.constant 0 : index
    %c0_0 = arith.constant 0 : index
    %c0_1 = arith.constant 0 : index
    %0 = vector.load %arg2[%c0, %c0_0, %c0_1] : memref<1x4x128xbf16, #tpu.memory_space<vmem>>, vector<1x4x128xbf16>
    %1 = vector.shape_cast %0 : vector<1x4x128xbf16> to vector<4x128xbf16>
    %c0_2 = arith.constant 0 : index
    %c0_3 = arith.constant 0 : index
    %c0_4 = arith.constant 0 : index
    %2 = vector.load %arg3[%c0_2, %c0_3, %c0_4] : memref<1x8x128xbf16, #tpu.memory_space<vmem>>, vector<1x8x128xbf16>
    %3 = vector.shape_cast %2 : vector<1x8x128xbf16> to vector<8x128xbf16>
    %c0_5 = arith.constant 0 : index
    %c0_6 = arith.constant 0 : index
    %4 = vector.load %arg4[%c0_5, %c0_6] : memref<8x4xbf16, #tpu.memory_space<vmem>>, vector<8x4xbf16>
    %cst = arith.constant dense<0.000000e+00> : vector<8x128xf32>
    %5 = tpu.matmul %4, %1, %cst {dimension_numbers = #tpu.dot_dimension_numbers<[1], [0], [0], [1], [0, 0, 1, 1], [], []>} : vector<8x4xbf16>, vector<4x128xbf16>, vector<8x128xf32> -> vector<8x128xf32>
    %c0_7 = arith.constant 0 : index
    %c0_8 = arith.constant 0 : index
    %6 = vector.load %arg5[%c0_7, %c0_8] : memref<8x8xbf16, #tpu.memory_space<vmem>>, vector<8x8xbf16>
    %cst_9 = arith.constant dense<0.000000e+00> : vector<8x128xf32>
    %7 = tpu.matmul %6, %3, %cst_9 {dimension_numbers = #tpu.dot_dimension_numbers<[1], [0], [0], [1], [0, 0, 1, 1], [], []>} : vector<8x8xbf16>, vector<8x128xbf16>, vector<8x128xf32> -> vector<8x128xf32>
    %8 = arith.addf %5, %7 : vector<8x128xf32>
    %c0_10 = arith.constant 0 : index
    %c0_11 = arith.constant 0 : index
    %9 = vector.load %arg6[%c0_10, %c0_11] : memref<8x1xf32, #tpu.memory_space<vmem>>, vector<8x1xf32>
    %10 = vector.broadcast %9 : vector<8x1xf32> to vector<8x128xf32>
    %11 = arith.addf %8, %10 : vector<8x128xf32>
    %cst_12 = arith.constant 0.000000e+00 : f32
    %12 = vector.broadcast %cst_12 : f32 to vector<8x128xf32>
    %13 = arith.maximumf %11, %12 : vector<8x128xf32>
    %14 = arith.truncf %13 : vector<8x128xf32> to vector<8x128xbf16>
    %c0_13 = arith.constant 0 : index
    %c0_14 = arith.constant 0 : index
    %15 = vector.load %arg7[%c0_13, %c0_14] : memref<2x8xbf16, #tpu.memory_space<vmem>>, vector<2x8xbf16>
    %cst_15 = arith.constant dense<0.000000e+00> : vector<2x128xf32>
    %16 = tpu.matmul %15, %14, %cst_15 {dimension_numbers = #tpu.dot_dimension_numbers<[1], [0], [0], [1], [0, 0, 1, 1], [], []>} : vector<2x8xbf16>, vector<8x128xbf16>, vector<2x128xf32> -> vector<2x128xf32>
    %c0_16 = arith.constant 0 : index
    %c0_17 = arith.constant 0 : index
    %17 = vector.load %arg8[%c0_16, %c0_17] : memref<2x1xf32, #tpu.memory_space<vmem>>, vector<2x1xf32>
    %18 = vector.broadcast %17 : vector<2x1xf32> to vector<2x128xf32>
    %19 = arith.addf %16, %18 : vector<2x128xf32>
    %cst_18 = arith.constant 0.000000e+00 : f32
    %20 = vector.broadcast %cst_18 : f32 to vector<2x128xf32>
    %21 = arith.maximumf %19, %20 : vector<2x128xf32>
    %c0_19 = arith.constant 0 : index
    %c0_20 = arith.constant 0 : index
    %22 = vector.load %arg9[%c0_19, %c0_20] : memref<8x2xbf16, #tpu.memory_space<vmem>>, vector<8x2xbf16>
    %23 = arith.truncf %21 : vector<2x128xf32> to vector<2x128xbf16>
    %cst_21 = arith.constant dense<0.000000e+00> : vector<8x128xf32>
    %24 = tpu.matmul %22, %23, %cst_21 {dimension_numbers = #tpu.dot_dimension_numbers<[1], [0], [0], [1], [0, 0, 1, 1], [], []>} : vector<8x2xbf16>, vector<2x128xbf16>, vector<8x128xf32> -> vector<8x128xf32>
    %c0_22 = arith.constant 0 : index
    %c0_23 = arith.constant 0 : index
    %25 = vector.load %arg10[%c0_22, %c0_23] : memref<8x1xf32, #tpu.memory_space<vmem>>, vector<8x1xf32>
    %26 = vector.broadcast %25 : vector<8x1xf32> to vector<8x128xf32>
    %27 = arith.addf %24, %26 : vector<8x128xf32>
    %c0_24 = arith.constant 0 : index
    %c0_25 = arith.constant 0 : index
    %28 = vector.load %arg15[%c0_24, %c0_25] : memref<128x2xbf16, #tpu.memory_space<vmem>>, vector<128x2xbf16>
    %cst_26 = arith.constant dense<0.000000e+00> : vector<8x2xf32>
    %29 = tpu.matmul %14, %28, %cst_26 {dimension_numbers = #tpu.dot_dimension_numbers<[1], [0], [0], [1], [0, 0, 1, 1], [], []>} : vector<8x128xbf16>, vector<128x2xbf16>, vector<8x2xf32> -> vector<8x2xf32>
    %cst_27 = arith.constant 1.562500e-02 : f32
    %30 = vector.broadcast %cst_27 : f32 to vector<8x2xf32>
    %31 = arith.mulf %29, %30 : vector<8x2xf32>
    %c0_28 = arith.constant 0 : index
    %c0_29 = arith.constant 0 : index
    %32 = vector.load %arg11[%c0_28, %c0_29] : memref<2x8xbf16, #tpu.memory_space<vmem>>, vector<2x8xbf16>
    %33 = arith.truncf %31 : vector<8x2xf32> to vector<8x2xbf16>
    %cst_30 = arith.constant dense<0.000000e+00> : vector<2x2xf32>
    %34 = tpu.matmul %32, %33, %cst_30 {dimension_numbers = #tpu.dot_dimension_numbers<[1], [0], [0], [1], [0, 0, 1, 1], [], []>} : vector<2x8xbf16>, vector<8x2xbf16>, vector<2x2xf32> -> vector<2x2xf32>
    %c0_31 = arith.constant 0 : index
    %c0_32 = arith.constant 0 : index
    %35 = vector.load %arg12[%c0_31, %c0_32] : memref<2x1xf32, #tpu.memory_space<vmem>>, vector<2x1xf32>
    %36 = vector.broadcast %35 : vector<2x1xf32> to vector<2x2xf32>
    %37 = arith.addf %34, %36 : vector<2x2xf32>
    %cst_33 = arith.constant 0.000000e+00 : f32
    %38 = vector.broadcast %cst_33 : f32 to vector<2x2xf32>
    %39 = arith.maximumf %37, %38 : vector<2x2xf32>
    %c0_34 = arith.constant 0 : index
    %c0_35 = arith.constant 0 : index
    %40 = vector.load %arg13[%c0_34, %c0_35] : memref<8x2xbf16, #tpu.memory_space<vmem>>, vector<8x2xbf16>
    %41 = arith.truncf %39 : vector<2x2xf32> to vector<2x2xbf16>
    %cst_36 = arith.constant dense<0.000000e+00> : vector<8x2xf32>
    %42 = tpu.matmul %40, %41, %cst_36 {dimension_numbers = #tpu.dot_dimension_numbers<[1], [0], [0], [1], [0, 0, 1, 1], [], []>} : vector<8x2xbf16>, vector<2x2xbf16>, vector<8x2xf32> -> vector<8x2xf32>
    %c0_37 = arith.constant 0 : index
    %c0_38 = arith.constant 0 : index
    %43 = vector.load %arg14[%c0_37, %c0_38] : memref<8x1xf32, #tpu.memory_space<vmem>>, vector<8x1xf32>
    %44 = vector.broadcast %43 : vector<8x1xf32> to vector<8x2xf32>
    %45 = arith.addf %42, %44 : vector<8x2xf32>
    %46 = arith.truncf %45 : vector<8x2xf32> to vector<8x2xbf16>
    %c0_39 = arith.constant 0 : index
    %c0_40 = arith.constant 0 : index
    %47 = vector.load %arg15[%c0_39, %c0_40] : memref<128x2xbf16, #tpu.memory_space<vmem>>, vector<128x2xbf16>
    %cst_41 = arith.constant dense<0.000000e+00> : vector<8x128xf32>
    %48 = tpu.matmul %46, %47, %cst_41 {dimension_numbers = #tpu.dot_dimension_numbers<[1], [1], [0], [0], [0, 0, 1, 0], [], []>} : vector<8x2xbf16>, vector<128x2xbf16>, vector<8x128xf32> -> vector<8x128xf32>
    %49 = arith.addf %27, %48 : vector<8x128xf32>
    %50 = arith.negf %49 : vector<8x128xf32>
    %51 = math.exp %50 : vector<8x128xf32>
    %cst_42 = arith.constant 1.000000e+00 : f32
    %52 = vector.broadcast %cst_42 : f32 to vector<8x128xf32>
    %53 = arith.addf %52, %51 : vector<8x128xf32>
    %54 = arith.divf %52, %53 : vector<8x128xf32>
    %55 = arith.extf %3 : vector<8x128xbf16> to vector<8x128xf32>
    %56 = arith.mulf %13, %54 : vector<8x128xf32>
    %57 = arith.addf %55, %56 : vector<8x128xf32>
    %58 = arith.truncf %57 : vector<8x128xf32> to vector<8x128xbf16>
    %c0_43 = arith.constant 0 : index
    %c0_44 = arith.constant 0 : index
    %c0_45 = arith.constant 0 : index
    %59 = vector.load %arg16[%c0_43, %c0_44, %c0_45] : memref<1x8x128xbf16, #tpu.memory_space<vmem>>, vector<1x8x128xbf16>
    %60 = vector.shape_cast %59 : vector<1x8x128xbf16> to vector<8x128xbf16>
    %61 = vector.shape_cast %58 : vector<8x128xbf16> to vector<1x8x128xbf16>
    tpu.vector_store %arg16[%c0_43, %c0_44, %c0_45], %61 {strides = array<i32>} : memref<1x8x128xbf16, #tpu.memory_space<vmem>>, vector<1x8x128xbf16>,
    return
  }
  func.func @transform_0(%arg0: i32, %arg1: i32) -> (i32, i32, i32) {
    %c0_i32 = arith.constant 0 : i32
    %c0_i32_0 = arith.constant 0 : i32
    return %arg0, %c0_i32, %arg1 : i32, i32, i32
  }
  func.func @transform_1(%arg0: i32, %arg1: i32) -> (i32, i32, i32) {
    %c0_i32 = arith.constant 0 : i32
    %c0_i32_0 = arith.constant 0 : i32
    return %arg0, %c0_i32, %arg1 : i32, i32, i32
  }
  func.func @transform_2(%arg0: i32, %arg1: i32) -> (i32, i32) {
    %c0_i32 = arith.constant 0 : i32
    %c0_i32_0 = arith.constant 0 : i32
    %c0_i32_1 = arith.constant 0 : i32
    return %c0_i32, %c0_i32_0 : i32, i32
  }
  func.func @transform_3(%arg0: i32, %arg1: i32) -> (i32, i32) {
    %c0_i32 = arith.constant 0 : i32
    %c0_i32_0 = arith.constant 0 : i32
    %c0_i32_1 = arith.constant 0 : i32
    return %c0_i32, %c0_i32_0 : i32, i32
  }
  func.func @transform_4(%arg0: i32, %arg1: i32) -> (i32, i32) {
    %c0_i32 = arith.constant 0 : i32
    %c0_i32_0 = arith.constant 0 : i32
    %c0_i32_1 = arith.constant 0 : i32
    return %c0_i32, %c0_i32_0 : i32, i32
  }
  func.func @transform_5(%arg0: i32, %arg1: i32) -> (i32, i32) {
    %c0_i32 = arith.constant 0 : i32
    %c0_i32_0 = arith.constant 0 : i32
    %c0_i32_1 = arith.constant 0 : i32
    return %c0_i32, %c0_i32_0 : i32, i32
  }
  func.func @transform_6(%arg0: i32, %arg1: i32) -> (i32, i32) {
    %c0_i32 = arith.constant 0 : i32
    %c0_i32_0 = arith.constant 0 : i32
    %c0_i32_1 = arith.constant 0 : i32
    return %c0_i32, %c0_i32_0 : i32, i32
  }
  func.func @transform_7(%arg0: i32, %arg1: i32) -> (i32, i32) {
    %c0_i32 = arith.constant 0 : i32
    %c0_i32_0 = arith.constant 0 : i32
    %c0_i32_1 = arith.constant 0 : i32
    return %c0_i32, %c0_i32_0 : i32, i32
  }
  func.func @transform_8(%arg0: i32, %arg1: i32) -> (i32, i32) {
    %c0_i32 = arith.constant 0 : i32
    %c0_i32_0 = arith.constant 0 : i32
    %c0_i32_1 = arith.constant 0 : i32
    return %c0_i32, %c0_i32_0 : i32, i32
  }
  func.func @transform_9(%arg0: i32, %arg1: i32) -> (i32, i32) {
    %c0_i32 = arith.constant 0 : i32
    %c0_i32_0 = arith.constant 0 : i32
    %c0_i32_1 = arith.constant 0 : i32
    return %c0_i32, %c0_i32_0 : i32, i32
  }
  func.func @transform_10(%arg0: i32, %arg1: i32) -> (i32, i32) {
    %c0_i32 = arith.constant 0 : i32
    %c0_i32_0 = arith.constant 0 : i32
    %c0_i32_1 = arith.constant 0 : i32
    return %c0_i32, %c0_i32_0 : i32, i32
  }
  func.func @transform_11(%arg0: i32, %arg1: i32) -> (i32, i32) {
    %c0_i32 = arith.constant 0 : i32
    %c0_i32_0 = arith.constant 0 : i32
    %c0_i32_1 = arith.constant 0 : i32
    return %c0_i32, %c0_i32_0 : i32, i32
  }
  func.func @transform_12(%arg0: i32, %arg1: i32) -> (i32, i32) {
    %c0_i32 = arith.constant 0 : i32
    %c0_i32_0 = arith.constant 0 : i32
    %c0_i32_1 = arith.constant 0 : i32
    return %c0_i32, %c0_i32_0 : i32, i32
  }
  func.func @transform_13(%arg0: i32, %arg1: i32) -> (i32, i32) {
    %c0_i32 = arith.constant 0 : i32
    %c0_i32_0 = arith.constant 0 : i32
    %c0_i32_1 = arith.constant 0 : i32
    return %c0_i32, %c0_i32_0 : i32, i32
  }
  func.func @transform_14(%arg0: i32, %arg1: i32) -> (i32, i32, i32) {
    %c0_i32 = arith.constant 0 : i32
    %c0_i32_0 = arith.constant 0 : i32
    return %arg0, %c0_i32, %arg1 : i32, i32, i32
  }
}

</mosaic_0001>

<llo_original>
// kernel: tpu_custom_call.1
$region0: #{tpu_custom_call.1}
  #allocation0 [shape = 'u32[]', space=smem, size = 0x4, offset = 0x4, fixed_abs, tag = 'smem constant byte address 0x4 - core index']
  #allocation1 [shape = 'u32[144,128]{1,0:T(1,128)}', space=vmem, size = 0x12000, scoped, tag = 'internal scratch']
  %s0 = inlined_call_operand.vmem [shape: bf16[2,4,256], index: 0, kind: input, shape index: {}]
  %s1 = inlined_call_operand.vmem [shape: bf16[2,8,256], index: 1, kind: input, shape index: {}]
  %s2 = inlined_call_operand.vmem [shape: bf16[8,4], index: 2, kind: input, shape index: {}]
  %s3 = inlined_call_operand.vmem [shape: bf16[8,8], index: 3, kind: input, shape index: {}]
  %s4 = inlined_call_operand.vmem [shape: f32[8,1], index: 4, kind: input, shape index: {}]
  %s5 = inlined_call_operand.vmem [shape: bf16[2,8], index: 5, kind: input, shape index: {}]
  %s6 = inlined_call_operand.vmem [shape: f32[2,1], index: 6, kind: input, shape index: {}]
  %s7 = inlined_call_operand.vmem [shape: bf16[8,2], index: 7, kind: input, shape index: {}]
  %s8 = inlined_call_operand.vmem [shape: f32[8,1], index: 8, kind: input, shape index: {}]
  %s9 = inlined_call_operand.vmem [shape: bf16[2,8], index: 9, kind: input, shape index: {}]
  %s10 = inlined_call_operand.vmem [shape: f32[2,1], index: 10, kind: input, shape index: {}]
  %s11 = inlined_call_operand.vmem [shape: bf16[8,2], index: 11, kind: input, shape index: {}]
  %s12 = inlined_call_operand.vmem [shape: f32[8,1], index: 12, kind: input, shape index: {}]
  %s13 = inlined_call_operand.vmem [shape: bf16[128,2], index: 13, kind: input, shape index: {}]
  %s14 = inlined_call_operand.hbm [shape: bf16[2,8,256], index: 14, kind: output, shape index: {}]
  %s15 = sld [smem:[#allocation0]]
  $region89: #{tpu_custom_call.1} parent=0
    _
  %s17 = ssub.s32 1, %s15
  %s18 = scalar_select 0, %s17, %s15
  $region1: #{tpu_custom_call.1} parent=0
    #allocation2 [shape = 'u8[4096]{0}', space=vmem, size = 0x1000, scoped, tag = 'output window, operand 0']
    #allocation3 [shape = 's32[2]{0}', space=sflag, size = 0x8, scoped, tag = 'scoped memory for tpu_custom_call.1']
    %19 = vsyncpa [#allocation3], 0
    %s20 = scalar_lea.sflag [#allocation3], 1
    %21 = vsyncpa %s20, 0
    loop: start=0, step=1, limit=6
    $region2: #{tpu_custom_call.1} parent=1 // loop_pre_header
      _
    $region3: #{tpu_custom_call.1} parent=1 // loop_header
      %s23 = sphi 0, %s27
      %p24 = scmp.ge.s32.totalorder %s23, 6
      %s30 = sphi 0, %s42
      %s31 = sphi 0, %s38
      %s32 = sphi 0, %s30
      %s33 = sphi 0, %s31
      %s34 = sphi 0, %s32
      %s35 = sphi 0, %s33
      %s47 = sphi 0, %s49
      %s50 = sphi 0, %s47
      %s51 = sphi 0, %s50
      %s67 = sphi 0, %s51
      %s75 = sphi 0, %s77
      %s78 = sphi 0, %s75
      %s79 = sphi 0, %s78
      %s95 = sphi 0, %s79
      %s99 = sphi 0, %s99
      %s101 = sphi 0, %s99
      %s102 = sphi 0, %s101
      %s116 = sphi 0, %s102
      %s120 = sphi 0, %s120
      %s122 = sphi 0, %s120
      %s123 = sphi 0, %s122
      %s137 = sphi 0, %s123
      %s141 = sphi 0, %s141
      %s143 = sphi 0, %s141
      %s144 = sphi 0, %s143
      %s158 = sphi 0, %s144
      %s162 = sphi 0, %s162
      %s164 = sphi 0, %s162
      %s165 = sphi 0, %s164
      %s179 = sphi 0, %s165
      %s183 = sphi 0, %s183
      %s185 = sphi 0, %s183
      %s186 = sphi 0, %s185
      %s200 = sphi 0, %s186
      %s204 = sphi 0, %s204
      %s206 = sphi 0, %s204
      %s207 = sphi 0, %s206
      %s221 = sphi 0, %s207
      %s225 = sphi 0, %s225
      %s227 = sphi 0, %s225
      %s228 = sphi 0, %s227
      %s242 = sphi 0, %s228
      %s246 = sphi 0, %s246
      %s248 = sphi 0, %s246
      %s249 = sphi 0, %s248
      %s263 = sphi 0, %s249
      %s267 = sphi 0, %s267
      %s269 = sphi 0, %s267
      %s270 = sphi 0, %s269
      %s284 = sphi 0, %s270
      %s288 = sphi 0, %s288
      %s290 = sphi 0, %s288
      %s291 = sphi 0, %s290
      %s305 = sphi 0, %s291
      %s309 = sphi 0, %s309
      %s311 = sphi 0, %s309
      %s312 = sphi 0, %s311
      %s326 = sphi 0, %s312
      %s330 = sphi 0, %s330
      %s332 = sphi 0, %s330
      %s333 = sphi 0, %s332
      %s347 = sphi 0, %s333
      %s355 = sphi 0, %s357
      %s358 = sphi 0, %s355
      %s359 = sphi 0, %s358
      %s375 = sphi 0, %s359
    $region4: #{tpu_custom_call.1} parent=1 // loop_header_branch
      %26 = sbr.rel (%p24) target = $region8
    $region5: #{tpu_custom_call.1} parent=1 // loop_body
      %s28 = ssub.s32 %s23, 1
      %s29 = ssub.s32 %s23, 2
      %s36 = sadd.s32 1, %s31
      %p37 = scmp.ge.s32.totalorder %s36, 2
      %s38 = scalar_select %p37, 0, %s36
      %s39 = sadd.s32 1, %s30
      %s40 = scalar_select %p37, %s39, %s30
      %p41 = scmp.ge.s32.totalorder %s40, 2
      %s42 = scalar_select %p41, 0, %s40
      %s43 = ssub.s32 %s30, %s42
      %s44 = ssub.s32 %s31, %s38
      %s45 = sor.u32 %s43, %s44
      %p46 = scmp.eq.s32.totalorder %s45, 0
      %s48 = sadd.s32 %s47, 1
      %s49 = scalar_select %p46, %s47, %s48
      %p52 = pneg %p46
      %p53 = scmp.eq.s32.totalorder %s23, 3
      %p54 = por %p52, %p53
      %p55 = scmp.ne.s32.totalorder %s47, %s50
      %p56 = scmp.eq.s32.totalorder %s23, 0
      %p57 = por %p55, %p56
      %p58 = scmp.ne.s32.totalorder %s47, %s50
      %p59 = scmp.eq.s32.totalorder %s28, 3
      %p60 = por %p58, %p59
      %p61 = scmp.ne.s32.totalorder %s50, %s51
      %p62 = scmp.eq.s32.totalorder %s28, 0
      %p63 = por %p61, %p62
      %p64 = scmp.ne.s32.totalorder %s50, %s51
      %p65 = scmp.eq.s32.totalorder %s29, 3
      %p66 = por %p64, %p65
      %p68 = scmp.ne.s32.totalorder %s51, %s67
      %p69 = scmp.eq.s32.totalorder %s29, 0
      %p70 = por %p68, %p69
      %s71 = ssub.s32 %s30, %s42
      %s72 = ssub.s32 %s31, %s38
      %s73 = sor.u32 %s71, %s72
      %p74 = scmp.eq.s32.totalorder %s73, 0
      %s76 = sadd.s32 %s75, 1
      %s77 = scalar_select %p74, %s75, %s76
      %p80 = pneg %p74
      %p81 = scmp.eq.s32.totalorder %s23, 3
      %p82 = por %p80, %p81
      %p83 = scmp.ne.s32.totalorder %s75, %s78
      %p84 = scmp.eq.s32.totalorder %s23, 0
      %p85 = por %p83, %p84
      %p86 = scmp.ne.s32.totalorder %s75, %s78
      %p87 = scmp.eq.s32.totalorder %s28, 3
      %p88 = por %p86, %p87
      %p89 = scmp.ne.s32.totalorder %s78, %s79
      %p90 = scmp.eq.s32.totalorder %s28, 0
      %p91 = por %p89, %p90
      %p92 = scmp.ne.s32.totalorder %s78, %s79
      %p93 = scmp.eq.s32.totalorder %s29, 3
      %p94 = por %p92, %p93
      %p96 = scmp.ne.s32.totalorder %s79, %s95
      %p97 = scmp.eq.s32.totalorder %s29, 0
      %p98 = por %p96, %p97
      %s100 = sadd.s32 %s99, 1
      %p103 = scmp.eq.s32.totalorder %s23, 3
      %p104 = scmp.ne.s32.totalorder %s99, %s101
      %p105 = scmp.eq.s32.totalorder %s23, 0
      %p106 = por %p104, %p105
      %p107 = scmp.ne.s32.totalorder %s99, %s101
      %p108 = scmp.eq.s32.totalorder %s28, 3
      %p109 = por %p107, %p108
      %p110 = scmp.ne.s32.totalorder %s101, %s102
      %p111 = scmp.eq.s32.totalorder %s28, 0
      %p112 = por %p110, %p111
      %p113 = scmp.ne.s32.totalorder %s101, %s102
      %p114 = scmp.eq.s32.totalorder %s29, 3
      %p115 = por %p113, %p114
      %p117 = scmp.ne.s32.totalorder %s102, %s116
      %p118 = scmp.eq.s32.totalorder %s29, 0
      %p119 = por %p117, %p118
      %s121 = sadd.s32 %s120, 1
      %p124 = scmp.eq.s32.totalorder %s23, 3
      %p125 = scmp.ne.s32.totalorder %s120, %s122
      %p126 = scmp.eq.s32.totalorder %s23, 0
      %p127 = por %p125, %p126
      %p128 = scmp.ne.s32.totalorder %s120, %s122
      %p129 = scmp.eq.s32.totalorder %s28, 3
      %p130 = por %p128, %p129
      %p131 = scmp.ne.s32.totalorder %s122, %s123
      %p132 = scmp.eq.s32.totalorder %s28, 0
      %p133 = por %p131, %p132
      %p134 = scmp.ne.s32.totalorder %s122, %s123
      %p135 = scmp.eq.s32.totalorder %s29, 3
      %p136 = por %p134, %p135
      %p138 = scmp.ne.s32.totalorder %s123, %s137
      %p139 = scmp.eq.s32.totalorder %s29, 0
      %p140 = por %p138, %p139
      %s142 = sadd.s32 %s141, 1
      %p145 = scmp.eq.s32.totalorder %s23, 3
      %p146 = scmp.ne.s32.totalorder %s141, %s143
      %p147 = scmp.eq.s32.totalorder %s23, 0
      %p148 = por %p146, %p147
      %p149 = scmp.ne.s32.totalorder %s141, %s143
      %p150 = scmp.eq.s32.totalorder %s28, 3
      %p151 = por %p149, %p150
      %p152 = scmp.ne.s32.totalorder %s143, %s144
      %p153 = scmp.eq.s32.totalorder %s28, 0
      %p154 = por %p152, %p153
      %p155 = scmp.ne.s32.totalorder %s143, %s144
      %p156 = scmp.eq.s32.totalorder %s29, 3
      %p157 = por %p155, %p156
      %p159 = scmp.ne.s32.totalorder %s144, %s158
      %p160 = scmp.eq.s32.totalorder %s29, 0
      %p161 = por %p159, %p160
      %s163 = sadd.s32 %s162, 1
      %p166 = scmp.eq.s32.totalorder %s23, 3
      %p167 = scmp.ne.s32.totalorder %s162, %s164
      %p168 = scmp.eq.s32.totalorder %s23, 0
      %p169 = por %p167, %p168
      %p170 = scmp.ne.s32.totalorder %s162, %s164
      %p171 = scmp.eq.s32.totalorder %s28, 3
      %p172 = por %p170, %p171
      %p173 = scmp.ne.s32.totalorder %s164, %s165
      %p174 = scmp.eq.s32.totalorder %s28, 0
      %p175 = por %p173, %p174
      %p176 = scmp.ne.s32.totalorder %s164, %s165
      %p177 = scmp.eq.s32.totalorder %s29, 3
      %p178 = por %p176, %p177
      %p180 = scmp.ne.s32.totalorder %s165, %s179
      %p181 = scmp.eq.s32.totalorder %s29, 0
      %p182 = por %p180, %p181
      %s184 = sadd.s32 %s183, 1
      %p187 = scmp.eq.s32.totalorder %s23, 3
      %p188 = scmp.ne.s32.totalorder %s183, %s185
      %p189 = scmp.eq.s32.totalorder %s23, 0
      %p190 = por %p188, %p189
      %p191 = scmp.ne.s32.totalorder %s183, %s185
      %p192 = scmp.eq.s32.totalorder %s28, 3
      %p193 = por %p191, %p192
      %p194 = scmp.ne.s32.totalorder %s185, %s186
      %p195 = scmp.eq.s32.totalorder %s28, 0
      %p196 = por %p194, %p195
      %p197 = scmp.ne.s32.totalorder %s185, %s186
      %p198 = scmp.eq.s32.totalorder %s29, 3
      %p199 = por %p197, %p198
      %p201 = scmp.ne.s32.totalorder %s186, %s200
      %p202 = scmp.eq.s32.totalorder %s29, 0
      %p203 = por %p201, %p202
      %s205 = sadd.s32 %s204, 1
      %p208 = scmp.eq.s32.totalorder %s23, 3
      %p209 = scmp.ne.s32.totalorder %s204, %s206
      %p210 = scmp.eq.s32.totalorder %s23, 0
      %p211 = por %p209, %p210
      %p212 = scmp.ne.s32.totalorder %s204, %s206
      %p213 = scmp.eq.s32.totalorder %s28, 3
      %p214 = por %p212, %p213
      %p215 = scmp.ne.s32.totalorder %s206, %s207
      %p216 = scmp.eq.s32.totalorder %s28, 0
      %p217 = por %p215, %p216
      %p218 = scmp.ne.s32.totalorder %s206, %s207
      %p219 = scmp.eq.s32.totalorder %s29, 3
      %p220 = por %p218, %p219
      %p222 = scmp.ne.s32.totalorder %s207, %s221
      %p223 = scmp.eq.s32.totalorder %s29, 0
      %p224 = por %p222, %p223
      %s226 = sadd.s32 %s225, 1
      %p229 = scmp.eq.s32.totalorder %s23, 3
      %p230 = scmp.ne.s32.totalorder %s225, %s227
      %p231 = scmp.eq.s32.totalorder %s23, 0
      %p232 = por %p230, %p231
      %p233 = scmp.ne.s32.totalorder %s225, %s227
      %p234 = scmp.eq.s32.totalorder %s28, 3
      %p235 = por %p233, %p234
      %p236 = scmp.ne.s32.totalorder %s227, %s228
      %p237 = scmp.eq.s32.totalorder %s28, 0
      %p238 = por %p236, %p237
      %p239 = scmp.ne.s32.totalorder %s227, %s228
      %p240 = scmp.eq.s32.totalorder %s29, 3
      %p241 = por %p239, %p240
      %p243 = scmp.ne.s32.totalorder %s228, %s242
      %p244 = scmp.eq.s32.totalorder %s29, 0
      %p245 = por %p243, %p244
      %s247 = sadd.s32 %s246, 1
      %p250 = scmp.eq.s32.totalorder %s23, 3
      %p251 = scmp.ne.s32.totalorder %s246, %s248
      %p252 = scmp.eq.s32.totalorder %s23, 0
      %p253 = por %p251, %p252
      %p254 = scmp.ne.s32.totalorder %s246, %s248
      %p255 = scmp.eq.s32.totalorder %s28, 3
      %p256 = por %p254, %p255
      %p257 = scmp.ne.s32.totalorder %s248, %s249
      %p258 = scmp.eq.s32.totalorder %s28, 0
      %p259 = por %p257, %p258
      %p260 = scmp.ne.s32.totalorder %s248, %s249
      %p261 = scmp.eq.s32.totalorder %s29, 3
      %p262 = por %p260, %p261
      %p264 = scmp.ne.s32.totalorder %s249, %s263
      %p265 = scmp.eq.s32.totalorder %s29, 0
      %p266 = por %p264, %p265
      %s268 = sadd.s32 %s267, 1
      %p271 = scmp.eq.s32.totalorder %s23, 3
      %p272 = scmp.ne.s32.totalorder %s267, %s269
      %p273 = scmp.eq.s32.totalorder %s23, 0
      %p274 = por %p272, %p273
      %p275 = scmp.ne.s32.totalorder %s267, %s269
      %p276 = scmp.eq.s32.totalorder %s28, 3
      %p277 = por %p275, %p276
      %p278 = scmp.ne.s32.totalorder %s269, %s270
      %p279 = scmp.eq.s32.totalorder %s28, 0
      %p280 = por %p278, %p279
      %p281 = scmp.ne.s32.totalorder %s269, %s270
      %p282 = scmp.eq.s32.totalorder %s29, 3
      %p283 = por %p281, %p282
      %p285 = scmp.ne.s32.totalorder %s270, %s284
      %p286 = scmp.eq.s32.totalorder %s29, 0
      %p287 = por %p285, %p286
      %s289 = sadd.s32 %s288, 1
      %p292 = scmp.eq.s32.totalorder %s23, 3
      %p293 = scmp.ne.s32.totalorder %s288, %s290
      %p294 = scmp.eq.s32.totalorder %s23, 0
      %p295 = por %p293, %p294
      %p296 = scmp.ne.s32.totalorder %s288, %s290
      %p297 = scmp.eq.s32.totalorder %s28, 3
      %p298 = por %p296, %p297
      %p299 = scmp.ne.s32.totalorder %s290, %s291
      %p300 = scmp.eq.s32.totalorder %s28, 0
      %p301 = por %p299, %p300
      %p302 = scmp.ne.s32.totalorder %s290, %s291
      %p303 = scmp.eq.s32.totalorder %s29, 3
      %p304 = por %p302, %p303
      %p306 = scmp.ne.s32.totalorder %s291, %s305
      %p307 = scmp.eq.s32.totalorder %s29, 0
      %p308 = por %p306, %p307
      %s310 = sadd.s32 %s309, 1
      %p313 = scmp.eq.s32.totalorder %s23, 3
      %p314 = scmp.ne.s32.totalorder %s309, %s311
      %p315 = scmp.eq.s32.totalorder %s23, 0
      %p316 = por %p314, %p315
      %p317 = scmp.ne.s32.totalorder %s309, %s311
      %p318 = scmp.eq.s32.totalorder %s28, 3
      %p319 = por %p317, %p318
      %p320 = scmp.ne.s32.totalorder %s311, %s312
      %p321 = scmp.eq.s32.totalorder %s28, 0
      %p322 = por %p320, %p321
      %p323 = scmp.ne.s32.totalorder %s311, %s312
      %p324 = scmp.eq.s32.totalorder %s29, 3
      %p325 = por %p323, %p324
      %p327 = scmp.ne.s32.totalorder %s312, %s326
      %p328 = scmp.eq.s32.totalorder %s29, 0
      %p329 = por %p327, %p328
      %s331 = sadd.s32 %s330, 1
      %p334 = scmp.eq.s32.totalorder %s23, 3
      %p335 = scmp.ne.s32.totalorder %s330, %s332
      %p336 = scmp.eq.s32.totalorder %s23, 0
      %p337 = por %p335, %p336
      %p338 = scmp.ne.s32.totalorder %s330, %s332
      %p339 = scmp.eq.s32.totalorder %s28, 3
      %p340 = por %p338, %p339
      %p341 = scmp.ne.s32.totalorder %s332, %s333
      %p342 = scmp.eq.s32.totalorder %s28, 0
      %p343 = por %p341, %p342
      %p344 = scmp.ne.s32.totalorder %s332, %s333
      %p345 = scmp.eq.s32.totalorder %s29, 3
      %p346 = por %p344, %p345
      %p348 = scmp.ne.s32.totalorder %s333, %s347
      %p349 = scmp.eq.s32.totalorder %s29, 0
      %p350 = por %p348, %p349
      %s351 = ssub.s32 %s30, %s42
      %s352 = ssub.s32 %s31, %s38
      %s353 = sor.u32 %s351, %s352
      %p354 = scmp.eq.s32.totalorder %s353, 0
      %s356 = sadd.s32 %s355, 1
      %s357 = scalar_select %p354, %s355, %s356
      %p360 = pneg %p354
      %p361 = scmp.eq.s32.totalorder %s23, 3
      %p362 = por %p360, %p361
      %p363 = scmp.ne.s32.totalorder %s355, %s358
      %p364 = scmp.eq.s32.totalorder %s23, 0
      %p365 = por %p363, %p364
      %p366 = scmp.ne.s32.totalorder %s355, %s358
      %p367 = scmp.eq.s32.totalorder %s28, 3
      %p368 = por %p366, %p367
      %p369 = scmp.ne.s32.totalorder %s358, %s359
      %p370 = scmp.eq.s32.totalorder %s28, 0
      %p371 = por %p369, %p370
      %p372 = scmp.ne.s32.totalorder %s358, %s359
      %p373 = scmp.eq.s32.totalorder %s29, 3
      %p374 = por %p372, %p373
      %p376 = scmp.ne.s32.totalorder %s359, %s375
      %p377 = scmp.eq.s32.totalorder %s29, 0
      %p378 = por %p376, %p377
      %p379 = scmp.le.s32.totalorder 1, %s23
      %p380 = scmp.lt.s32.totalorder %s23, 5
      %p381 = pnand %p379, %p380
      %p382 = pneg %p381
      // Predicated region
      $region9: #{tpu_custom_call.1} parent=5 // pred_check
        _
      $region10: #{tpu_custom_call.1} parent=5 // pred_check_branch
        %384 = sbr.rel (%p381) target = $region12
      $region11: #{tpu_custom_call.1} parent=5 // pred_region
        %s385 = ssub.s32 %s23, 1
        // Predicated region
        $region13: #{tpu_custom_call.1} parent=11 // pred_check
          %p386 = pneg %p112
        $region14: #{tpu_custom_call.1} parent=11 // pred_check_branch
          %388 = sbr.rel (%p386) target = $region16
        $region15: #{tpu_custom_call.1} parent=11 // pred_region
          _
        $region16: #{tpu_custom_call.1} parent=11 // pred_fallthru
          _
        // Predicated region
        $region17: #{tpu_custom_call.1} parent=11 // pred_check
          %p389 = pneg %p133
        $region18: #{tpu_custom_call.1} parent=11 // pred_check_branch
          %391 = sbr.rel (%p389) target = $region20
        $region19: #{tpu_custom_call.1} parent=11 // pred_region
          _
        $region20: #{tpu_custom_call.1} parent=11 // pred_fallthru
          _
        // Predicated region
        $region21: #{tpu_custom_call.1} parent=11 // pred_check
          %p392 = pneg %p154
        $region22: #{tpu_custom_call.1} parent=11 // pred_check_branch
          %394 = sbr.rel (%p392) target = $region24
        $region23: #{tpu_custom_call.1} parent=11 // pred_region
          _
        $region24: #{tpu_custom_call.1} parent=11 // pred_fallthru
          _
        // Predicated region
        $region25: #{tpu_custom_call.1} parent=11 // pred_check
          %p395 = pneg %p175
        $region26: #{tpu_custom_call.1} parent=11 // pred_check_branch
          %397 = sbr.rel (%p395) target = $region28
        $region27: #{tpu_custom_call.1} parent=11 // pred_region
          _
        $region28: #{tpu_custom_call.1} parent=11 // pred_fallthru
          _
        // Predicated region
        $region29: #{tpu_custom_call.1} parent=11 // pred_check
          %p398 = pneg %p196
        $region30: #{tpu_custom_call.1} parent=11 // pred_check_branch
          %400 = sbr.rel (%p398) target = $region32
        $region31: #{tpu_custom_call.1} parent=11 // pred_region
          _
        $region32: #{tpu_custom_call.1} parent=11 // pred_fallthru
          _
        // Predicated region
        $region33: #{tpu_custom_call.1} parent=11 // pred_check
          %p401 = pneg %p217
        $region34: #{tpu_custom_call.1} parent=11 // pred_check_branch
          %403 = sbr.rel (%p401) target = $region36
        $region35: #{tpu_custom_call.1} parent=11 // pred_region
          _
        $region36: #{tpu_custom_call.1} parent=11 // pred_fallthru
          _
        // Predicated region
        $region37: #{tpu_custom_call.1} parent=11 // pred_check
          %p404 = pneg %p238
        $region38: #{tpu_custom_call.1} parent=11 // pred_check_branch
          %406 = sbr.rel (%p404) target = $region40
        $region39: #{tpu_custom_call.1} parent=11 // pred_region
          _
        $region40: #{tpu_custom_call.1} parent=11 // pred_fallthru
          _
        // Predicated region
        $region41: #{tpu_custom_call.1} parent=11 // pred_check
          %p407 = pneg %p259
        $region42: #{tpu_custom_call.1} parent=11 // pred_check_branch
          %409 = sbr.rel (%p407) target = $region44
        $region43: #{tpu_custom_call.1} parent=11 // pred_region
          _
        $region44: #{tpu_custom_call.1} parent=11 // pred_fallthru
          _
        // Predicated region
        $region45: #{tpu_custom_call.1} parent=11 // pred_check
          %p410 = pneg %p280
        $region46: #{tpu_custom_call.1} parent=11 // pred_check_branch
          %412 = sbr.rel (%p410) target = $region48
        $region47: #{tpu_custom_call.1} parent=11 // pred_region
          _
        $region48: #{tpu_custom_call.1} parent=11 // pred_fallthru
          _
        // Predicated region
        $region49: #{tpu_custom_call.1} parent=11 // pred_check
          %p413 = pneg %p301
        $region50: #{tpu_custom_call.1} parent=11 // pred_check_branch
          %415 = sbr.rel (%p413) target = $region52
        $region51: #{tpu_custom_call.1} parent=11 // pred_region
          _
        $region52: #{tpu_custom_call.1} parent=11 // pred_fallthru
          _
        // Predicated region
        $region53: #{tpu_custom_call.1} parent=11 // pred_check
          %p416 = pneg %p322
        $region54: #{tpu_custom_call.1} parent=11 // pred_check_branch
          %418 = sbr.rel (%p416) target = $region56
        $region55: #{tpu_custom_call.1} parent=11 // pred_region
          _
        $region56: #{tpu_custom_call.1} parent=11 // pred_fallthru
          _
        // Predicated region
        $region57: #{tpu_custom_call.1} parent=11 // pred_check
          %p419 = pneg %p343
        $region58: #{tpu_custom_call.1} parent=11 // pred_check_branch
          %421 = sbr.rel (%p419) target = $region60
        $region59: #{tpu_custom_call.1} parent=11 // pred_region
          _
        $region60: #{tpu_custom_call.1} parent=11 // pred_fallthru
          _
      $region12: #{tpu_custom_call.1} parent=5 // pred_fallthru
        _
      %p422 = scmp.lt.s32.totalorder %s23, 4
      // Predicated region
      $region61: #{tpu_custom_call.1} parent=5 // pred_check
        %p423 = pneg %p422
      $region62: #{tpu_custom_call.1} parent=5 // pred_check_branch
        %425 = sbr.rel (%p423) target = $region64
      $region63: #{tpu_custom_call.1} parent=5 // pred_region
        // Predicated region
        $region65: #{tpu_custom_call.1} parent=63 // pred_check
          %p426 = pneg %p57
        $region66: #{tpu_custom_call.1} parent=63 // pred_check_branch
          %428 = sbr.rel (%p426) target = $region68
        $region67: #{tpu_custom_call.1} parent=63 // pred_region
          %p429 = scmp.lt.s32.totalorder %s30, 1
          %s430 = scalar_select %p429, %s30, 1
          %p431 = scmp.lt.s32.totalorder %s31, 1
          %s432 = scalar_select %p431, %s31, 1
          %s433 = smul.addr %s430, 2
          %s434 = sadd.s32 %s432, %s433
          %s435 = smul.addr %s434, 2
          %s436 = scalar_lea.vmem %s0, %s435
        $region68: #{tpu_custom_call.1} parent=63 // pred_fallthru
          _
        // Predicated region
        $region69: #{tpu_custom_call.1} parent=63 // pred_check
          %p437 = pneg %p85
        $region70: #{tpu_custom_call.1} parent=63 // pred_check_branch
          %439 = sbr.rel (%p437) target = $region72
        $region71: #{tpu_custom_call.1} parent=63 // pred_region
          %p440 = scmp.lt.s32.totalorder %s30, 1
          %s441 = scalar_select %p440, %s30, 1
          %p442 = scmp.lt.s32.totalorder %s31, 1
          %s443 = scalar_select %p442, %s31, 1
          %s444 = smul.addr %s441, 2
          %s445 = sadd.s32 %s443, %s444
          %s446 = smul.addr %s445, 4
          %s447 = scalar_lea.vmem %s1, %s446
        $region72: #{tpu_custom_call.1} parent=63 // pred_fallthru
          _
      $region64: #{tpu_custom_call.1} parent=5 // pred_fallthru
        _
      %p448 = scmp.le.s32.totalorder 1, %s23
      %p449 = scmp.lt.s32.totalorder %s23, 5
      %p450 = pnand %p448, %p449
      %p451 = pneg %p450
      // Predicated region
      $region73: #{tpu_custom_call.1} parent=5 // pred_check
        _
      $region74: #{tpu_custom_call.1} parent=5 // pred_check_branch
        %453 = sbr.rel (%p450) target = $region76
      $region75: #{tpu_custom_call.1} parent=5 // pred_region
        %s454 = ssub.s32 %s23, 1
        %p455 = scmp.lt.s32.totalorder %s32, 1
        %s456 = scalar_select %p455, %s32, 1
        %p457 = scmp.lt.s32.totalorder %s33, 1
        %s458 = scalar_select %p457, %s33, 1
        %s459 = smul.addr %s456, 2
        %s460 = sadd.s32 %s458, %s459
        %s461 = smul.addr %s460, 2
        %s462 = scalar_lea.vmem %s0, %s461
        %p463 = pneg %p63
        %p464 = pneg %p60
        %p465 = scmp.lt.s32.totalorder %s32, 1
        %s466 = scalar_select %p465, %s32, 1
        %p467 = scmp.lt.s32.totalorder %s33, 1
        %s468 = scalar_select %p467, %s33, 1
        %s469 = smul.addr %s466, 2
        %s470 = sadd.s32 %s468, %s469
        %s471 = smul.addr %s470, 4
        %s472 = scalar_lea.vmem %s1, %s471
        %p473 = pneg %p91
        %p474 = pneg %p88
        %p475 = pneg %p112
        %p476 = pneg %p109
        %p477 = pneg %p133
        %p478 = pneg %p130
        %p479 = pneg %p154
        %p480 = pneg %p151
        %p481 = pneg %p175
        %p482 = pneg %p172
        %p483 = pneg %p196
        %p484 = pneg %p193
        %p485 = pneg %p217
        %p486 = pneg %p214
        %p487 = pneg %p238
        %p488 = pneg %p235
        %p489 = pneg %p259
        %p490 = pneg %p256
        %p491 = pneg %p280
        %p492 = pneg %p277
        %p493 = pneg %p301
        %p494 = pneg %p298
        %p495 = pneg %p322
        %p496 = pneg %p319
        %p497 = pneg %p343
        %p498 = pneg %p340
        %p499 = pneg %p371
        %p500 = pneg %p368
        %s501 = sand.u32 %s358, 1
        %s502 = scalar_lea.sflag [#allocation3], %s501
        %s503 = sand.u32 %s358, 1
        %s504 = smul.addr %s503, 4
        %s505 = scalar_lea.vmem [#allocation2], %s504
        %p506 = scmp.lt.s32.totalorder %s32, 1
        %s507 = scalar_select %p506, %s32, 1
        %p508 = scmp.lt.s32.totalorder %s33, 1
        %s509 = scalar_select %p508, %s33, 1
        %s510 = smul.addr %s507, 2
        %s511 = sadd.s32 %s509, %s510
        %s512 = smul.addr %s511, 2
        %s513 = scalar_lea.vmem %s0, %s512
        %p514 = scmp.lt.s32.totalorder %s32, 1
        %s515 = scalar_select %p514, %s32, 1
        %p516 = scmp.lt.s32.totalorder %s33, 1
        %s517 = scalar_select %p516, %s33, 1
        %s518 = smul.addr %s515, 2
        %s519 = sadd.s32 %s517, %s518
        %s520 = smul.addr %s519, 4
        %s521 = scalar_lea.vmem %s1, %s520
        %v523 = vld [vmem:[%s513] sm:$0x3]
        %v524 = vld [vmem:[%s521] sm:$0xf]
        %v525 = vld [vmem:[%s2] sm:$0xf]
        %v526 = vld [vmem:[%s3] sm:$0xf]
        %vm527 = vcmask 64512
        %v529 = vsel %vm527, %v526, 0
        %vm531 = vcmask 1043456
        %v533 = vsel %vm531, %v524, 0
        %535 = vmatprep.subr.bf16.mxu0 0
        %536 = vmatpush1.bf16.msra.mxu0 0
        %537 = vmatprep.subr.bf16.mxu0 0
        %538 = vmatpush1.bf16.msra.mxu0 0
        %539 = vmatprep.subr.bf16.mxu0 0
        %540 = vmatpush1.bf16.msra.mxu0 0
        %541 = vmatprep.subr.bf16.mxu0 0
        %542 = vmatpush1.bf16.msra.mxu0 0
        %543 = vmatprep.subr.bf16.mxu0 0
        %544 = vmatpush1.bf16.msra.mxu0 0
        %545 = vmatprep.subr.bf16.mxu0 0
        %546 = vmatpush1.bf16.msra.mxu0 0
        %547 = vmatprep.subr.bf16.mxu0 0
        %548 = vmatpush1.bf16.msra.mxu0 0
        %549 = vmatprep.subr.bf16.mxu0 0
        %550 = vmatpush1.bf16.msra.mxu0 %v533
        %551 = vmatprep.subr.bf16.mxu0 0
        %552 = vmatpush2.bf16.msra.mxu0 0
        %553 = vmatprep.subr.bf16.mxu0 0
        %554 = vmatpush2.bf16.msra.mxu0 0
        %555 = vmatprep.subr.bf16.mxu0 0
        %556 = vmatpush2.bf16.msra.mxu0 0
        %557 = vmatprep.subr.bf16.mxu0 0
        %558 = vmatpush2.bf16.msra.mxu0 0
        %559 = vmatprep.subr.bf16.mxu0 0
        %560 = vmatpush2.bf16.msra.mxu0 0
        %561 = vmatprep.subr.bf16.mxu0 0
        %562 = vmatpush2.bf16.msra.mxu0 0
        %563 = vmatprep.subr.bf16.mxu0 0
        %564 = vmatpush2.bf16.msra.mxu0 0
        %565 = vmatprep.subr.bf16.mxu0 0
        %566 = vmatpush2.bf16.msra.mxu0 0
        %567 = vmatprep.mubr.bf16.mxu0 0
        %568 = vmatmul.mubr.bf16.gmra.mxu0 %v529
        %v569 = vpop.f32.mrf.mxu0
        %v570 = vadd.f32 0.0, %v569
        %v571 = vpop.f32.mrf.mxu0
        %v572 = vpop.f32.mrf.mxu0
        %v573 = vpop.f32.mrf.mxu0
        %574 = vdwg.mxu0
        %vm575 = vcmask 31744
        %v577 = vsel %vm575, %v525, 0
        %vm579 = vcmask 1041408
        %v581 = vsel %vm579, %v523, 0
        %583 = vmatprep.subr.bf16.mxu0 0
        %584 = vmatpush1.bf16.msra.mxu0 0
        %585 = vmatprep.subr.bf16.mxu0 0
        %586 = vmatpush1.bf16.msra.mxu0 0
        %587 = vmatprep.subr.bf16.mxu0 0
        %588 = vmatpush1.bf16.msra.mxu0 0
        %589 = vmatprep.subr.bf16.mxu0 0
        %590 = vmatpush1.bf16.msra.mxu0 0
        %591 = vmatprep.subr.bf16.mxu0 0
        %592 = vmatpush1.bf16.msra.mxu0 0
        %593 = vmatprep.subr.bf16.mxu0 0
        %594 = vmatpush1.bf16.msra.mxu0 0
        %595 = vmatprep.subr.bf16.mxu0 0
        %596 = vmatpush1.bf16.msra.mxu0 0
        %597 = vmatprep.subr.bf16.mxu0 0
        %598 = vmatpush1.bf16.msra.mxu0 %v581
        %599 = vmatprep.subr.bf16.mxu0 0
        %600 = vmatpush2.bf16.msra.mxu0 0
        %601 = vmatprep.subr.bf16.mxu0 0
        %602 = vmatpush2.bf16.msra.mxu0 0
        %603 = vmatprep.subr.bf16.mxu0 0
        %604 = vmatpush2.bf16.msra.mxu0 0
        %605 = vmatprep.subr.bf16.mxu0 0
        %606 = vmatpush2.bf16.msra.mxu0 0
        %607 = vmatprep.subr.bf16.mxu0 0
        %608 = vmatpush2.bf16.msra.mxu0 0
        %609 = vmatprep.subr.bf16.mxu0 0
        %610 = vmatpush2.bf16.msra.mxu0 0
        %611 = vmatprep.subr.bf16.mxu0 0
        %612 = vmatpush2.bf16.msra.mxu0 0
        %613 = vmatprep.subr.bf16.mxu0 0
        %614 = vmatpush2.bf16.msra.mxu0 0
        %615 = vmatprep.mubr.bf16.mxu0 0
        %616 = vmatmul.mubr.bf16.gmra.mxu0 %v577
        %v617 = vpop.f32.mrf.mxu0
        %v618 = vadd.f32 %v570, %v617
        %v619 = vpop.f32.mrf.mxu0
        %v620 = vpop.f32.mrf.mxu0
        %v621 = vpop.f32.mrf.mxu0
        %622 = vdwg.mxu0
        %v623 = vld [vmem:[%s4] sm:$0xff]
        %625 = vset.pattern.permute.xlu0 0
        %626 = vperm.xlu0 %625, %v623
        %v627 = vpop.permute.xlu0 %626
        %v629 = vadd.f32 %v618, %v627
        %v630 = vmax.f32 %v629, 0.0
        %v631 = vpack.c.bf16 %v630, %v630
        %v632 = vld [vmem:[%s5] sm:$0x1]
        %v633 = vld [vmem:[%s6] sm:$0x3]
        %635 = vset.pattern.permute.xlu0 0
        %636 = vperm.xlu0 %635, %v633
        %v637 = vpop.permute.xlu0 %636
        %v640 = vsel %vm527, %v632, 0
        %v643 = vsel %vm531, %v631, 0
        %645 = vmatprep.subr.bf16.mxu0 0
        %646 = vmatpush1.bf16.msra.mxu0 0
        %647 = vmatprep.subr.bf16.mxu0 0
        %648 = vmatpush1.bf16.msra.mxu0 0
        %649 = vmatprep.subr.bf16.mxu0 0
        %650 = vmatpush1.bf16.msra.mxu0 0
        %651 = vmatprep.subr.bf16.mxu0 0
        %652 = vmatpush1.bf16.msra.mxu0 0
        %653 = vmatprep.subr.bf16.mxu0 0
        %654 = vmatpush1.bf16.msra.mxu0 0
        %655 = vmatprep.subr.bf16.mxu0 0
        %656 = vmatpush1.bf16.msra.mxu0 0
        %657 = vmatprep.subr.bf16.mxu0 0
        %658 = vmatpush1.bf16.msra.mxu0 0
        %659 = vmatprep.subr.bf16.mxu0 0
        %660 = vmatpush1.bf16.msra.mxu0 %v643
        %661 = vmatprep.subr.bf16.mxu0 0
        %662 = vmatpush2.bf16.msra.mxu0 0
        %663 = vmatprep.subr.bf16.mxu0 0
        %664 = vmatpush2.bf16.msra.mxu0 0
        %665 = vmatprep.subr.bf16.mxu0 0
        %666 = vmatpush2.bf16.msra.mxu0 0
        %667 = vmatprep.subr.bf16.mxu0 0
        %668 = vmatpush2.bf16.msra.mxu0 0
        %669 = vmatprep.subr.bf16.mxu0 0
        %670 = vmatpush2.bf16.msra.mxu0 0
        %671 = vmatprep.subr.bf16.mxu0 0
        %672 = vmatpush2.bf16.msra.mxu0 0
        %673 = vmatprep.subr.bf16.mxu0 0
        %674 = vmatpush2.bf16.msra.mxu0 0
        %675 = vmatprep.subr.bf16.mxu0 0
        %676 = vmatpush2.bf16.msra.mxu0 0
        %677 = vmatprep.mubr.bf16.mxu0 0
        %678 = vmatmul.mubr.bf16.gmra.mxu0 %v640
        %v679 = vpop.f32.mrf.mxu0
        %v680 = vadd.f32 %v637, %v679
        %v681 = vpop.f32.mrf.mxu0
        %v682 = vpop.f32.mrf.mxu0
        %v683 = vpop.f32.mrf.mxu0
        %684 = vdwg.mxu0
        %v685 = vmax.f32 %v680, 0.0
        %v686 = vld [vmem:[%s7] sm:$0xf]
        %v687 = vpack.c.bf16 %v685, %v685
        %v688 = vld [vmem:[%s8] sm:$0xff]
        %690 = vset.pattern.permute.xlu0 0
        %691 = vperm.xlu0 %690, %v688
        %v692 = vpop.permute.xlu0 %691
        %vm694 = vcmask 15360
        %v696 = vsel %vm694, %v686, 0
        %vm698 = vcmask 1040384
        %v700 = vsel %vm698, %v687, 0
        %702 = vmatprep.subr.bf16.mxu0 0
        %703 = vmatpush1.bf16.msra.mxu0 0
        %704 = vmatprep.subr.bf16.mxu0 0
        %705 = vmatpush1.bf16.msra.mxu0 0
        %706 = vmatprep.subr.bf16.mxu0 0
        %707 = vmatpush1.bf16.msra.mxu0 0
        %708 = vmatprep.subr.bf16.mxu0 0
        %709 = vmatpush1.bf16.msra.mxu0 0
        %710 = vmatprep.subr.bf16.mxu0 0
        %711 = vmatpush1.bf16.msra.mxu0 0
        %712 = vmatprep.subr.bf16.mxu0 0
        %713 = vmatpush1.bf16.msra.mxu0 0
        %714 = vmatprep.subr.bf16.mxu0 0
        %715 = vmatpush1.bf16.msra.mxu0 0
        %716 = vmatprep.subr.bf16.mxu0 0
        %717 = vmatpush1.bf16.msra.mxu0 %v700
        %718 = vmatprep.subr.bf16.mxu0 0
        %719 = vmatpush2.bf16.msra.mxu0 0
        %720 = vmatprep.subr.bf16.mxu0 0
        %721 = vmatpush2.bf16.msra.mxu0 0
        %722 = vmatprep.subr.bf16.mxu0 0
        %723 = vmatpush2.bf16.msra.mxu0 0
        %724 = vmatprep.subr.bf16.mxu0 0
        %725 = vmatpush2.bf16.msra.mxu0 0
        %726 = vmatprep.subr.bf16.mxu0 0
        %727 = vmatpush2.bf16.msra.mxu0 0
        %728 = vmatprep.subr.bf16.mxu0 0
        %729 = vmatpush2.bf16.msra.mxu0 0
        %730 = vmatprep.subr.bf16.mxu0 0
        %731 = vmatpush2.bf16.msra.mxu0 0
        %732 = vmatprep.subr.bf16.mxu0 0
        %733 = vmatpush2.bf16.msra.mxu0 0
        %734 = vmatprep.mubr.bf16.mxu0 0
        %735 = vmatmul.mubr.bf16.gmra.mxu0 %v696
        %v736 = vpop.f32.mrf.mxu0
        %v737 = vadd.f32 %v692, %v736
        %v738 = vpop.f32.mrf.mxu0
        %v739 = vpop.f32.mrf.mxu0
        %v740 = vpop.f32.mrf.mxu0
        %741 = vdwg.mxu0
        %v742 = vld [vmem:[%s13] sm:$0xf]
        %v743 = vld [vmem:[%s13 + $0x4] sm:$0xf]
        %v744 = vld [vmem:[%s13 + $0x8] sm:$0xf]
        %v745 = vld [vmem:[%s13 + $0xc] sm:$0xf]
        %v746 = vld [vmem:[%s13 + $0x10] sm:$0xf]
        %v747 = vld [vmem:[%s13 + $0x14] sm:$0xf]
        %v748 = vld [vmem:[%s13 + $0x18] sm:$0xf]
        %v749 = vld [vmem:[%s13 + $0x1c] sm:$0xf]
        %v750 = vld [vmem:[%s13 + $0x20] sm:$0xf]
        %v751 = vld [vmem:[%s13 + $0x24] sm:$0xf]
        %v752 = vld [vmem:[%s13 + $0x28] sm:$0xf]
        %v753 = vld [vmem:[%s13 + $0x2c] sm:$0xf]
        %v754 = vld [vmem:[%s13 + $0x30] sm:$0xf]
        %v755 = vld [vmem:[%s13 + $0x34] sm:$0xf]
        %v756 = vld [vmem:[%s13 + $0x38] sm:$0xf]
        %v757 = vld [vmem:[%s13 + $0x3c] sm:$0xf]
        %v774 = vunpack.c.l.b16 %v742
        %v775 = vunpack.c.l.b16 %v743
        %v776 = vunpack.c.l.b16 %v744
        %v777 = vunpack.c.l.b16 %v745
        %v778 = vunpack.c.l.b16 %v746
        %v779 = vunpack.c.l.b16 %v747
        %v780 = vunpack.c.l.b16 %v748
        %v781 = vunpack.c.l.b16 %v749
        %v782 = vunpack.c.l.b16 %v750
        %v783 = vunpack.c.l.b16 %v751
        %v784 = vunpack.c.l.b16 %v752
        %v785 = vunpack.c.l.b16 %v753
        %v786 = vunpack.c.l.b16 %v754
        %v787 = vunpack.c.l.b16 %v755
        %v788 = vunpack.c.l.b16 %v756
        %v789 = vunpack.c.l.b16 %v757
        %v790 = vpack.c.b16 %v775, %v774
        %v791 = vpack.c.b16 %v777, %v776
        %v792 = vpack.c.b16 %v779, %v778
        %v793 = vpack.c.b16 %v781, %v780
        %v794 = vpack.c.b16 %v783, %v782
        %v795 = vpack.c.b16 %v785, %v784
        %v796 = vpack.c.b16 %v787, %v786
        %v797 = vpack.c.b16 %v789, %v788
        %806 = vmatprep.subr.bf16.mxu0 0
        %807 = vmatpush1.bf16.msra.mxu0 %v797
        %808 = vmatprep.subr.bf16.mxu0 0
        %809 = vmatpush1.bf16.msra.mxu0 %v796
        %810 = vmatprep.subr.bf16.mxu0 0
        %811 = vmatpush1.bf16.msra.mxu0 %v795
        %812 = vmatprep.subr.bf16.mxu0 0
        %813 = vmatpush1.bf16.msra.mxu0 %v794
        %814 = vmatprep.subr.bf16.mxu0 0
        %815 = vmatpush1.bf16.msra.mxu0 %v793
        %816 = vmatprep.subr.bf16.mxu0 0
        %817 = vmatpush1.bf16.msra.mxu0 %v792
        %818 = vmatprep.subr.bf16.mxu0 0
        %819 = vmatpush1.bf16.msra.mxu0 %v791
        %820 = vmatprep.subr.bf16.mxu0 0
        %821 = vmatpush1.bf16.msra.mxu0 %v790
        %822 = vmatprep.subr.bf16.mxu0 0
        %823 = vmatpush2.bf16.msra.mxu0 0
        %824 = vmatprep.subr.bf16.mxu0 0
        %825 = vmatpush2.bf16.msra.mxu0 0
        %826 = vmatprep.subr.bf16.mxu0 0
        %827 = vmatpush2.bf16.msra.mxu0 0
        %828 = vmatprep.subr.bf16.mxu0 0
        %829 = vmatpush2.bf16.msra.mxu0 0
        %830 = vmatprep.subr.bf16.mxu0 0
        %831 = vmatpush2.bf16.msra.mxu0 0
        %832 = vmatprep.subr.bf16.mxu0 0
        %833 = vmatpush2.bf16.msra.mxu0 0
        %834 = vmatprep.subr.bf16.mxu0 0
        %835 = vmatpush2.bf16.msra.mxu0 0
        %836 = vmatprep.subr.bf16.mxu0 0
        %837 = vmatpush2.bf16.msra.mxu0 0
        %838 = vmatprep.mubr.bf16.mxu0 0
        %839 = vmatmul.mubr.bf16.gmra.mxu0 %v631
        %v840 = vpop.f32.mrf.mxu0
        %v841 = vadd.f32 0.0, %v840
        %v842 = vpop.f32.mrf.mxu0
        %v843 = vpop.f32.mrf.mxu0
        %v844 = vpop.f32.mrf.mxu0
        %845 = vdwg.mxu0
        %v846 = vmul.f32 %v841, 0.015625
        %v847 = vld [vmem:[%s9] sm:$0x1]
        %v848 = vpack.c.bf16 %v846, %v846
        %v849 = vld [vmem:[%s10] sm:$0x3]
        %851 = vset.pattern.permute.xlu0 0
        %852 = vperm.xlu0 %851, %v849
        %v853 = vpop.permute.xlu0 %852
        %v856 = vsel %vm527, %v847, 0
        %v859 = vsel %vm531, %v848, 0
        %861 = vmatprep.subr.bf16.mxu0 0
        %862 = vmatpush1.bf16.msra.mxu0 0
        %863 = vmatprep.subr.bf16.mxu0 0
        %864 = vmatpush1.bf16.msra.mxu0 0
        %865 = vmatprep.subr.bf16.mxu0 0
        %866 = vmatpush1.bf16.msra.mxu0 0
        %867 = vmatprep.subr.bf16.mxu0 0
        %868 = vmatpush1.bf16.msra.mxu0 0
        %869 = vmatprep.subr.bf16.mxu0 0
        %870 = vmatpush1.bf16.msra.mxu0 0
        %871 = vmatprep.subr.bf16.mxu0 0
        %872 = vmatpush1.bf16.msra.mxu0 0
        %873 = vmatprep.subr.bf16.mxu0 0
        %874 = vmatpush1.bf16.msra.mxu0 0
        %875 = vmatprep.subr.bf16.mxu0 0
        %876 = vmatpush1.bf16.msra.mxu0 %v859
        %877 = vmatprep.subr.bf16.mxu0 0
        %878 = vmatpush2.bf16.msra.mxu0 0
        %879 = vmatprep.subr.bf16.mxu0 0
        %880 = vmatpush2.bf16.msra.mxu0 0
        %881 = vmatprep.subr.bf16.mxu0 0
        %882 = vmatpush2.bf16.msra.mxu0 0
        %883 = vmatprep.subr.bf16.mxu0 0
        %884 = vmatpush2.bf16.msra.mxu0 0
        %885 = vmatprep.subr.bf16.mxu0 0
        %886 = vmatpush2.bf16.msra.mxu0 0
        %887 = vmatprep.subr.bf16.mxu0 0
        %888 = vmatpush2.bf16.msra.mxu0 0
        %889 = vmatprep.subr.bf16.mxu0 0
        %890 = vmatpush2.bf16.msra.mxu0 0
        %891 = vmatprep.subr.bf16.mxu0 0
        %892 = vmatpush2.bf16.msra.mxu0 0
        %893 = vmatprep.mubr.bf16.mxu0 0
        %894 = vmatmul.mubr.bf16.gmra.mxu0 %v856
        %v895 = vpop.f32.mrf.mxu0
        %v896 = vadd.f32 %v853, %v895
        %v897 = vpop.f32.mrf.mxu0
        %v898 = vpop.f32.mrf.mxu0
        %v899 = vpop.f32.mrf.mxu0
        %900 = vdwg.mxu0
        %v901 = vmax.f32 %v896, 0.0
        %v902 = vld [vmem:[%s11] sm:$0xf]
        %v903 = vpack.c.bf16 %v901, %v901
        %v904 = vld [vmem:[%s12] sm:$0xff]
        %906 = vset.pattern.permute.xlu0 0
        %907 = vperm.xlu0 %906, %v904
        %v908 = vpop.permute.xlu0 %907
        %v911 = vsel %vm694, %v902, 0
        %v914 = vsel %vm698, %v903, 0
        %916 = vmatprep.subr.bf16.mxu0 0
        %917 = vmatpush1.bf16.msra.mxu0 0
        %918 = vmatprep.subr.bf16.mxu0 0
        %919 = vmatpush1.bf16.msra.mxu0 0
        %920 = vmatprep.subr.bf16.mxu0 0
        %921 = vmatpush1.bf16.msra.mxu0 0
        %922 = vmatprep.subr.bf16.mxu0 0
        %923 = vmatpush1.bf16.msra.mxu0 0
        %924 = vmatprep.subr.bf16.mxu0 0
        %925 = vmatpush1.bf16.msra.mxu0 0
        %926 = vmatprep.subr.bf16.mxu0 0
        %927 = vmatpush1.bf16.msra.mxu0 0
        %928 = vmatprep.subr.bf16.mxu0 0
        %929 = vmatpush1.bf16.msra.mxu0 0
        %930 = vmatprep.subr.bf16.mxu0 0
        %931 = vmatpush1.bf16.msra.mxu0 %v914
        %932 = vmatprep.subr.bf16.mxu0 0
        %933 = vmatpush2.bf16.msra.mxu0 0
        %934 = vmatprep.subr.bf16.mxu0 0
        %935 = vmatpush2.bf16.msra.mxu0 0
        %936 = vmatprep.subr.bf16.mxu0 0
        %937 = vmatpush2.bf16.msra.mxu0 0
        %938 = vmatprep.subr.bf16.mxu0 0
        %939 = vmatpush2.bf16.msra.mxu0 0
        %940 = vmatprep.subr.bf16.mxu0 0
        %941 = vmatpush2.bf16.msra.mxu0 0
        %942 = vmatprep.subr.bf16.mxu0 0
        %943 = vmatpush2.bf16.msra.mxu0 0
        %944 = vmatprep.subr.bf16.mxu0 0
        %945 = vmatpush2.bf16.msra.mxu0 0
        %946 = vmatprep.subr.bf16.mxu0 0
        %947 = vmatpush2.bf16.msra.mxu0 0
        %948 = vmatprep.mubr.bf16.mxu0 0
        %949 = vmatmul.mubr.bf16.gmra.mxu0 %v911
        %v950 = vpop.f32.mrf.mxu0
        %v951 = vadd.f32 %v908, %v950
        %v952 = vpop.f32.mrf.mxu0
        %v953 = vpop.f32.mrf.mxu0
        %v954 = vpop.f32.mrf.mxu0
        %955 = vdwg.mxu0
        %v956 = vpack.c.bf16 %v951, %v951
        %v958 = vsel %vm694, %v956, 0
        %v961 = vsel %vm694, %v790, 0
        %v964 = vsel %vm694, %v791, 0
        %v967 = vsel %vm694, %v792, 0
        %v970 = vsel %vm694, %v793, 0
        %v973 = vsel %vm694, %v794, 0
        %v976 = vsel %vm694, %v795, 0
        %v979 = vsel %vm694, %v796, 0
        %v982 = vsel %vm694, %v797, 0
        %984 = vmatprep.subr.bf16.mxu0 0
        %985 = vmatpush1.bf16.xpose.msra.mxu0 %v982
        %986 = vmatprep.subr.bf16.mxu0 0
        %987 = vmatpush1.bf16.xpose.msra.mxu0 %v979
        %988 = vmatprep.subr.bf16.mxu0 0
        %989 = vmatpush1.bf16.xpose.msra.mxu0 %v976
        %990 = vmatprep.subr.bf16.mxu0 0
        %991 = vmatpush1.bf16.xpose.msra.mxu0 %v973
        %992 = vmatprep.subr.bf16.mxu0 0
        %993 = vmatpush1.bf16.xpose.msra.mxu0 %v970
        %994 = vmatprep.subr.bf16.mxu0 0
        %995 = vmatpush1.bf16.xpose.msra.mxu0 %v967
        %996 = vmatprep.subr.bf16.mxu0 0
        %997 = vmatpush1.bf16.xpose.msra.mxu0 %v964
        %998 = vmatprep.subr.bf16.mxu0 0
        %999 = vmatpush1.bf16.xpose.msra.mxu0 %v961
        %1000 = vmatprep.subr.bf16.mxu0 0
        %1001 = vmatpush2.bf16.xpose.msra.mxu0 0
        %1002 = vmatprep.subr.bf16.mxu0 0
        %1003 = vmatpush2.bf16.xpose.msra.mxu0 0
        %1004 = vmatprep.subr.bf16.mxu0 0
        %1005 = vmatpush2.bf16.xpose.msra.mxu0 0
        %1006 = vmatprep.subr.bf16.mxu0 0
        %1007 = vmatpush2.bf16.xpose.msra.mxu0 0
        %1008 = vmatprep.subr.bf16.mxu0 0
        %1009 = vmatpush2.bf16.xpose.msra.mxu0 0
        %1010 = vmatprep.subr.bf16.mxu0 0
        %1011 = vmatpush2.bf16.xpose.msra.mxu0 0
        %1012 = vmatprep.subr.bf16.mxu0 0
        %1013 = vmatpush2.bf16.xpose.msra.mxu0 0
        %1014 = vmatprep.subr.bf16.mxu0 0
        %1015 = vmatpush2.bf16.xpose.msra.mxu0 0
        %1016 = vmatprep.mubr.bf16.mxu0 0
        %1017 = vmatmul.mubr.bf16.gmra.mxu0 %v958
        %v1018 = vpop.f32.mrf.mxu0
        %v1019 = vadd.f32 0.0, %v1018
        %v1020 = vpop.f32.mrf.mxu0
        %v1021 = vpop.f32.mrf.mxu0
        %v1022 = vpop.f32.mrf.mxu0
        %1023 = vdwg.mxu0
        %v1024 = vadd.f32 %v737, %v1019
        %v1025 = vxor.u32 %v1024, 2147483648
        %v1026 = vmul.f32 %v1025, 1.442695
        %v1027 = vpow.pop %v1026
        %v1028 = vadd.f32 %v1027, 1.0
        %v1029 = vrcp.pop %v1028
        %v1030 = vmul.f32 1.0, %v1029
        %v1031 = vunpack.c.l.bf16 %v524
        %v1032 = vmul.f32 %v630, %v1030
        %v1033 = vadd.f32 %v1031, %v1032
        %v1034 = vpack.c.bf16 %v1033, %v1033
        %1035 = vst [vmem:[%s505] sm:$0xf] %v1034
        %s1036 = sand.u32 %s358, 1
        %s1037 = scalar_lea.sflag [#allocation3], %s1036
        %s1038 = sand.u32 %s358, 1
        %s1039 = smul.addr %s1038, 4
        %s1040 = scalar_lea.vmem [#allocation2], %s1039
        // Predicated region
        $region77: #{tpu_custom_call.1} parent=75 // pred_check
          %p1041 = pneg %p368
        $region78: #{tpu_custom_call.1} parent=75 // pred_check_branch
          %1043 = sbr.rel (%p1041) target = $region80
        $region79: #{tpu_custom_call.1} parent=75 // pred_region
          %s1045 = ssub.s32 64, 64
          %1046 = vsyncadd %s1037, %s1045
          %s1047 = smul.addr %s32, 2
          %s1048 = sadd.s32 %s33, %s1047
          %s1049 = smul.addr %s1048, 64
          %s1050 = scalar_lea.hbm %s14, %s1049
          %s1052 = sshll.u32 %s1040, 4
          %s1053 = int_to_ptr.vmem [resolvable:$true] %s1052
          %1055 = dma.vmem_to_hbm [thread:$0]  %s1053, 64, %s1050, %s1037
        $region80: #{tpu_custom_call.1} parent=75 // pred_fallthru
          _
      $region76: #{tpu_custom_call.1} parent=5 // pred_fallthru
        _
      %p1056 = scmp.le.s32.totalorder 2, %s23
      // Predicated region
      $region81: #{tpu_custom_call.1} parent=5 // pred_check
        %p1057 = pneg %p1056
      $region82: #{tpu_custom_call.1} parent=5 // pred_check_branch
        %1059 = sbr.rel (%p1057) target = $region84
      $region83: #{tpu_custom_call.1} parent=5 // pred_region
        %s1060 = ssub.s32 %s23, 2
        // Predicated region
        $region85: #{tpu_custom_call.1} parent=83 // pred_check
          %p1061 = pneg %p374
        $region86: #{tpu_custom_call.1} parent=83 // pred_check_branch
          %1063 = sbr.rel (%p1061) target = $region88
        $region87: #{tpu_custom_call.1} parent=83 // pred_region
          %s1064 = sand.u32 %s359, 1
          %s1065 = scalar_lea.sflag [#allocation3], %s1064
          %s1066 = sand.u32 %s359, 1
          %s1067 = smul.addr %s1066, 4
          %s1068 = scalar_lea.vmem [#allocation2], %s1067
          %1069 = dma.done %s1065, 64
        $region88: #{tpu_custom_call.1} parent=83 // pred_fallthru
          _
      $region84: #{tpu_custom_call.1} parent=5 // pred_fallthru
        _
    $region6: #{tpu_custom_call.1} parent=1 // loop_footer
      %s27 = sadd.s32 1, %s23
    $region7: #{tpu_custom_call.1} parent=1 // loop_footer_branch
      %22 = sbr.rel target = $region3
    $region8: #{tpu_custom_call.1} parent=1 // loop_exit
      _
    %1070 = vsyncpa [#allocation3], 1
    %s1071 = scalar_lea.sflag [#allocation3], 1
    %1072 = vsyncpa %s1071, 1

</llo_original>
